<compile_context>
chip_gen: v5e
topology: v5e:2x2
jax: 0.10.0
libtpu: 0.0.40
codegen_flags: <defaults>
</compile_context>

<pallas_src>
import functools

import jax
import jax.numpy as jnp
from jax.experimental import pallas as pl
from jax.experimental.pallas import tpu as pltpu


def _round_up(x: int, m: int) -> int:
    return ((x + m - 1) // m) * m


def _mlp_kernel(*refs, num_layers):
    """Fused MLP: num_layers x (Linear [+ ReLU]) in one kernel body.

    refs layout:
      refs[0]                      : x_ref    (M_pad, K0)
      refs[1 + 2*i], refs[2 + 2*i] : w_ref_i  (K_pad_i, N_pad_i)  [bf16]
                                     b_ref_i  (8, N_pad_i)        [f32]
      refs[-1]                     : o_ref    (M_pad, N_pad_last)

    The running activation is kept as a value (vregs), never staged through
    VMEM scratch between layers.
    """
    x_ref = refs[0]
    o_ref = refs[-1]

    cur = x_ref[...]
    m = cur.shape[0]
    for i in range(num_layers):
        w_ref = refs[1 + 2 * i]
        b_ref = refs[2 + 2 * i]

        # MXU matmul in the weight dtype (bf16), f32 accumulation.
        y = jnp.dot(cur.astype(w_ref.dtype), w_ref[...],
                    preferred_element_type=jnp.float32)

        # f32 epilogue: bias add (+ ReLU on all but the last layer).
        b = b_ref[...]
        y = y + (b if m == b.shape[0] else b[0:1, :])
        if i < num_layers - 1:
            y = jnp.maximum(y, 0.0)
        cur = y

    o_ref[...] = cur.astype(o_ref.dtype)


def init_mlp_params(key, input_dim, hidden_dim, output_dim, num_layers,
                    dtype=jnp.float32):
    """nn.Linear-style init: W_i (out, in), b_i (out,), U(-1/sqrt(fan_in), ...)."""
    h = [hidden_dim] * (num_layers - 1)
    dims_in = [input_dim] + h
    dims_out = h + [output_dim]
    params = []
    for n_in, n_out in zip(dims_in, dims_out):
        key, kw, kb = jax.random.split(key, 3)
        bound = 1.0 / jnp.sqrt(jnp.asarray(n_in, dtype))
        w = jax.random.uniform(kw, (n_out, n_in), dtype, -bound, bound)
        b = jax.random.uniform(kb, (n_out,), dtype, -bound, bound)
        params.append((w, b))
    return params


def prepare_mlp_params(params, compute_dtype=jnp.bfloat16):
    """One-time prep (hoisted out of the forward hot path):
      * transpose weights to (in, out), cast to bf16, zero-pad feature dims
        to multiples of 128 so every matmul / store is lane-dense
        (the layer-0 contraction dim keeps its true size -- full-extent
        blocks are legal below 128 and it skips padding x in the wrapper);
      * keep biases in f32, zero-padded, replicated across 8 sublanes.
    All padding is zero-filled so padded rows/cols contribute exactly 0.
    """
    dims = tuple([params[0][0].shape[1]] + [w.shape[0] for w, _ in params])
    w_ts, bs = [], []
    for i, (w, b) in enumerate(params):
        k, n = dims[i], dims[i + 1]
        kp = k if i == 0 else _round_up(k, 128)
        np_ = _round_up(n, 128)
        w_t = (jnp.zeros((kp, np_), compute_dtype)
               .at[:k, :n].set(w.T.astype(compute_dtype)))
        b_p = (jnp.zeros((8, np_), jnp.float32)
               .at[:, :n].set(jnp.broadcast_to(b.astype(jnp.float32), (8, n))))
        w_ts.append(w_t)
        bs.append(b_p)
    return w_ts, bs, dims


def mlp_forward_pallas(x, w_ts, bs, dims):
    """Single fused pallas_call for the whole MLP.  x: (batch, input_dim)."""
    num_layers = len(w_ts)
    M, K0 = x.shape
    assert K0 == dims[0]

    M_pad = _round_up(max(M, 1), 8)
    if M_pad != M:
        # Zero-fill (never garbage) so pad rows stay finite; they pick up the
        # bias and are sliced off below.
        x_in = jnp.zeros((M_pad, K0), x.dtype).at[:M, :].set(x)
    else:
        x_in = x  # no wrapper-side pad materialization on the hot path

    n_out_pad = bs[-1].shape[1]

    in_specs = [pl.BlockSpec((M_pad, K0), lambda i: (0, 0))]
    operands = [x_in]
    for li in range(num_layers):
        kp, np_ = w_ts[li].shape
        in_specs.append(pl.BlockSpec((kp, np_), lambda i: (0, 0)))
        in_specs.append(pl.BlockSpec((8, np_), lambda i: (0, 0)))
        operands.append(w_ts[li])
        operands.append(bs[li])

    kernel = functools.partial(_mlp_kernel, num_layers=num_layers)

    out_pad = pl.pallas_call(
        kernel,
        out_shape=jax.ShapeDtypeStruct((M_pad, n_out_pad), x.dtype),
        grid_spec=pl.GridSpec(
            grid=(1,),
            in_specs=in_specs,
            out_specs=pl.BlockSpec((M_pad, n_out_pad), lambda i: (0, 0)),
        ),
        compiler_params=pltpu.CompilerParams(
            dimension_semantics=("arbitrary",),
        ),
    )(*operands)

    return out_pad[:M, : dims[-1]]


def mlp_reference(x, params):
    """Pure-JAX reference for correctness checking (PyTorch-layout params)."""
    num_layers = len(params)
    for i, (w, b) in enumerate(params):
        x = x @ w.T + b
        if i < num_layers - 1:
            x = jnp.maximum(x, 0.0)
    return x


if __name__ == "__main__":
    # Small shapes consistent with the module's forward.
    batch = 8
    input_dim, hidden_dim, output_dim, num_layers = 32, 64, 16, 3

    key = jax.random.PRNGKey(0)
    key, kx = jax.random.split(key)
    x = jax.random.normal(kx, (batch, input_dim), jnp.float32)

    params = init_mlp_params(key, input_dim, hidden_dim, output_dim, num_layers)
    w_ts, bs, dims = prepare_mlp_params(params)  # bf16 weights, f32 biases

    fwd = jax.jit(mlp_forward_pallas, static_argnums=(3,))
    out = jax.block_until_ready(fwd(x, w_ts, bs, dims))

    ref = mlp_reference(x, params)  # f32 reference
    assert out.shape == (batch, output_dim)
    # bf16 MXU inputs with f32 accumulation: allow bf16-level tolerance.
    assert jnp.allclose(out, ref, atol=3e-2, rtol=3e-2), \
        float(jnp.max(jnp.abs(out - ref)))

    print("KERNEL_OK")
</pallas_src>

<mosaic_0001>
module attributes {stable_mosaic.version = 11 : i64} {
  func.func @_mlp_kernel(%arg0: i32, %arg1: memref<8x32xf32, #tpu.memory_space<vmem>>, %arg2: memref<32x128xbf16, #tpu.memory_space<vmem>>, %arg3: memref<8x128xf32, #tpu.memory_space<vmem>>, %arg4: memref<128x128xbf16, #tpu.memory_space<vmem>>, %arg5: memref<8x128xf32, #tpu.memory_space<vmem>>, %arg6: memref<128x128xbf16, #tpu.memory_space<vmem>>, %arg7: memref<8x128xf32, #tpu.memory_space<vmem>>, %arg8: memref<8x128xf32, #tpu.memory_space<vmem>>) attributes {dimension_semantics = [#tpu.dimension_semantics<arbitrary>], iteration_bounds = array<i64: 1>, scalar_prefetch = 0 : i64, scratch_operands = 0 : i64, tpu.core_type = #tpu.core_type<tc>, window_params = [{pipeline_mode = #tpu.pipeline_mode<synchronous>, transform_indices = @transform_0, window_bounds = array<i64: 8, 32>}, {pipeline_mode = #tpu.pipeline_mode<synchronous>, transform_indices = @transform_1, window_bounds = array<i64: 32, 128>}, {pipeline_mode = #tpu.pipeline_mode<synchronous>, transform_indices = @transform_2, window_bounds = array<i64: 8, 128>}, {pipeline_mode = #tpu.pipeline_mode<synchronous>, transform_indices = @transform_3, window_bounds = array<i64: 128, 128>}, {pipeline_mode = #tpu.pipeline_mode<synchronous>, transform_indices = @transform_4, window_bounds = array<i64: 8, 128>}, {pipeline_mode = #tpu.pipeline_mode<synchronous>, transform_indices = @transform_5, window_bounds = array<i64: 128, 128>}, {pipeline_mode = #tpu.pipeline_mode<synchronous>, transform_indices = @transform_6, window_bounds = array<i64: 8, 128>}, {pipeline_mode = #tpu.pipeline_mode<synchronous>, transform_indices = @transform_7, window_bounds = array<i64: 8, 128>}]} {
    %c0 = arith.constant 0 : index
    %c0_0 = arith.constant 0 : index
    %0 = vector.load %arg1[%c0, %c0_0] : memref<8x32xf32, #tpu.memory_space<vmem>>, vector<8x32xf32>
    %1 = arith.truncf %0 : vector<8x32xf32> to vector<8x32xbf16>
    %c0_1 = arith.constant 0 : index
    %c0_2 = arith.constant 0 : index
    %2 = vector.load %arg2[%c0_1, %c0_2] : memref<32x128xbf16, #tpu.memory_space<vmem>>, vector<32x128xbf16>
    %cst = arith.constant dense<0.000000e+00> : vector<8x128xf32>
    %3 = tpu.matmul %1, %2, %cst {dimension_numbers = #tpu.dot_dimension_numbers<[1], [0], [0], [1], [0, 0, 1, 1], [], []>} : vector<8x32xbf16>, vector<32x128xbf16>, vector<8x128xf32> -> vector<8x128xf32>
    %c0_3 = arith.constant 0 : index
    %c0_4 = arith.constant 0 : index
    %4 = vector.load %arg3[%c0_3, %c0_4] : memref<8x128xf32, #tpu.memory_space<vmem>>, vector<8x128xf32>
    %5 = arith.addf %3, %4 : vector<8x128xf32>
    %cst_5 = arith.constant 0.000000e+00 : f32
    %6 = vector.broadcast %cst_5 : f32 to vector<8x128xf32>
    %7 = arith.maximumf %5, %6 : vector<8x128xf32>
    %8 = arith.truncf %7 : vector<8x128xf32> to vector<8x128xbf16>
    %c0_6 = arith.constant 0 : index
    %c0_7 = arith.constant 0 : index
    %9 = vector.load %arg4[%c0_6, %c0_7] : memref<128x128xbf16, #tpu.memory_space<vmem>>, vector<128x128xbf16>
    %cst_8 = arith.constant dense<0.000000e+00> : vector<8x128xf32>
    %10 = tpu.matmul %8, %9, %cst_8 {dimension_numbers = #tpu.dot_dimension_numbers<[1], [0], [0], [1], [0, 0, 1, 1], [], []>} : vector<8x128xbf16>, vector<128x128xbf16>, vector<8x128xf32> -> vector<8x128xf32>
    %c0_9 = arith.constant 0 : index
    %c0_10 = arith.constant 0 : index
    %11 = vector.load %arg5[%c0_9, %c0_10] : memref<8x128xf32, #tpu.memory_space<vmem>>, vector<8x128xf32>
    %12 = arith.addf %10, %11 : vector<8x128xf32>
    %cst_11 = arith.constant 0.000000e+00 : f32
    %13 = vector.broadcast %cst_11 : f32 to vector<8x128xf32>
    %14 = arith.maximumf %12, %13 : vector<8x128xf32>
    %15 = arith.truncf %14 : vector<8x128xf32> to vector<8x128xbf16>
    %c0_12 = arith.constant 0 : index
    %c0_13 = arith.constant 0 : index
    %16 = vector.load %arg6[%c0_12, %c0_13] : memref<128x128xbf16, #tpu.memory_space<vmem>>, vector<128x128xbf16>
    %cst_14 = arith.constant dense<0.000000e+00> : vector<8x128xf32>
    %17 = tpu.matmul %15, %16, %cst_14 {dimension_numbers = #tpu.dot_dimension_numbers<[1], [0], [0], [1], [0, 0, 1, 1], [], []>} : vector<8x128xbf16>, vector<128x128xbf16>, vector<8x128xf32> -> vector<8x128xf32>
    %c0_15 = arith.constant 0 : index
    %c0_16 = arith.constant 0 : index
    %18 = vector.load %arg7[%c0_15, %c0_16] : memref<8x128xf32, #tpu.memory_space<vmem>>, vector<8x128xf32>
    %19 = arith.addf %17, %18 : vector<8x128xf32>
    %c0_17 = arith.constant 0 : index
    %c0_18 = arith.constant 0 : index
    %20 = vector.load %arg8[%c0_17, %c0_18] : memref<8x128xf32, #tpu.memory_space<vmem>>, vector<8x128xf32>
    tpu.vector_store %arg8[%c0_17, %c0_18], %19 {strides = array<i32>} : memref<8x128xf32, #tpu.memory_space<vmem>>, vector<8x128xf32>,
    return
  }
  func.func @transform_0(%arg0: i32) -> (i32, i32) {
    %c0_i32 = arith.constant 0 : i32
    %c0_i32_0 = arith.constant 0 : i32
    %c0_i32_1 = arith.constant 0 : i32
    return %c0_i32, %c0_i32_0 : i32, i32
  }
  func.func @transform_1(%arg0: i32) -> (i32, i32) {
    %c0_i32 = arith.constant 0 : i32
    %c0_i32_0 = arith.constant 0 : i32
    %c0_i32_1 = arith.constant 0 : i32
    return %c0_i32, %c0_i32_0 : i32, i32
  }
  func.func @transform_2(%arg0: i32) -> (i32, i32) {
    %c0_i32 = arith.constant 0 : i32
    %c0_i32_0 = arith.constant 0 : i32
    %c0_i32_1 = arith.constant 0 : i32
    return %c0_i32, %c0_i32_0 : i32, i32
  }
  func.func @transform_3(%arg0: i32) -> (i32, i32) {
    %c0_i32 = arith.constant 0 : i32
    %c0_i32_0 = arith.constant 0 : i32
    %c0_i32_1 = arith.constant 0 : i32
    return %c0_i32, %c0_i32_0 : i32, i32
  }
  func.func @transform_4(%arg0: i32) -> (i32, i32) {
    %c0_i32 = arith.constant 0 : i32
    %c0_i32_0 = arith.constant 0 : i32
    %c0_i32_1 = arith.constant 0 : i32
    return %c0_i32, %c0_i32_0 : i32, i32
  }
  func.func @transform_5(%arg0: i32) -> (i32, i32) {
    %c0_i32 = arith.constant 0 : i32
    %c0_i32_0 = arith.constant 0 : i32
    %c0_i32_1 = arith.constant 0 : i32
    return %c0_i32, %c0_i32_0 : i32, i32
  }
  func.func @transform_6(%arg0: i32) -> (i32, i32) {
    %c0_i32 = arith.constant 0 : i32
    %c0_i32_0 = arith.constant 0 : i32
    %c0_i32_1 = arith.constant 0 : i32
    return %c0_i32, %c0_i32_0 : i32, i32
  }
  func.func @transform_7(%arg0: i32) -> (i32, i32) {
    %c0_i32 = arith.constant 0 : i32
    %c0_i32_0 = arith.constant 0 : i32
    %c0_i32_1 = arith.constant 0 : i32
    return %c0_i32, %c0_i32_0 : i32, i32
  }
}

</mosaic_0001>

<llo_original>
// kernel: mlp_forward_pallas.1
$region0: #{mlp_forward_pallas.1}
  #allocation0 [shape = 'u32[]', space=smem, size = 0x4, offset = 0x4, fixed_abs, tag = 'smem constant byte address 0x4 - core index']
  #allocation1 [shape = 'u32[72,128]{1,0:T(1,128)}', space=vmem, size = 0x9000, scoped, tag = 'internal scratch']
  %s0 = inlined_call_operand.hbm [shape: f32[8,32], index: 0, kind: input, shape index: {}]
  %s1 = inlined_call_operand.hbm [shape: bf16[32,128], index: 1, kind: input, shape index: {}]
  %s2 = inlined_call_operand.hbm [shape: f32[8,128], index: 2, kind: input, shape index: {}]
  %s3 = inlined_call_operand.hbm [shape: bf16[128,128], index: 3, kind: input, shape index: {}]
  %s4 = inlined_call_operand.hbm [shape: f32[8,128], index: 4, kind: input, shape index: {}]
  %s5 = inlined_call_operand.hbm [shape: bf16[128,128], index: 5, kind: input, shape index: {}]
  %s6 = inlined_call_operand.hbm [shape: f32[8,128], index: 6, kind: input, shape index: {}]
  %s7 = inlined_call_operand.hbm [shape: f32[8,128], index: 7, kind: output, shape index: {}]
  %s8 = sld [smem:[#allocation0]]
  $region66: #{mlp_forward_pallas.1} parent=0
    _
  %s10 = ssub.s32 1, %s8
  %s11 = scalar_select 0, %s10, %s8
  $region1: #{mlp_forward_pallas.1} parent=0
    #allocation2 [shape = 'u8[4096]{0}', space=vmem, size = 0x1000, scoped, tag = 'input window, operand 0, single buffered']
    #allocation3 [shape = 's32[1]{0}', space=sflag, size = 0x4, scoped, tag = 'scoped memory for mlp_forward_pallas.1']
    #allocation4 [shape = 's32[1]{0}', space=sflag, size = 0x4, scoped, tag = 'scoped memory for mlp_forward_pallas.1']
    #allocation5 [shape = 'u8[8192]{0}', space=vmem, size = 0x2000, scoped, tag = 'input window, operand 1, single buffered']
    #allocation6 [shape = 's32[1]{0}', space=sflag, size = 0x4, scoped, tag = 'scoped memory for mlp_forward_pallas.1']
    #allocation7 [shape = 'u8[4096]{0}', space=vmem, size = 0x1000, scoped, tag = 'input window, operand 2, single buffered']
    #allocation8 [shape = 'u8[32768]{0}', space=vmem, size = 0x8000, scoped, tag = 'input window, operand 3, single buffered']
    #allocation9 [shape = 's32[1]{0}', space=sflag, size = 0x4, scoped, tag = 'scoped memory for mlp_forward_pallas.1']
    #allocation10 [shape = 'u8[4096]{0}', space=vmem, size = 0x1000, scoped, tag = 'input window, operand 4, single buffered']
    #allocation11 [shape = 'u8[32768]{0}', space=vmem, size = 0x8000, scoped, tag = 'input window, operand 5, single buffered']
    #allocation12 [shape = 's32[1]{0}', space=sflag, size = 0x4, scoped, tag = 'scoped memory for mlp_forward_pallas.1']
    #allocation13 [shape = 'u8[4096]{0}', space=vmem, size = 0x1000, scoped, tag = 'input window, operand 6, single buffered']
    #allocation14 [shape = 'u8[4096]{0}', space=vmem, size = 0x1000, scoped, tag = 'output window, operand 0, single buffered']
    %12 = vsyncpa [#allocation3], 0
    %13 = vsyncpa [#allocation6], 0
    %14 = vsyncpa [#allocation9], 0
    %15 = vsyncpa [#allocation12], 0
    %16 = vsyncpa [#allocation4], 0
    // Predicated region
    $region2: #{mlp_forward_pallas.1} parent=1 // pred_check
      _
    $region3: #{mlp_forward_pallas.1} parent=1 // pred_check_branch
      %18 = sbr.rel (0) target = $region5
    $region4: #{mlp_forward_pallas.1} parent=1 // pred_region
      %20 = vsyncadd [#allocation3], 0
      %s22 = sshll.u32 %s0, 4
      %s23 = int_to_ptr.hbm [resolvable:$true] %s22
      %s24 = sshll.u32 [#allocation2], 4
      %s25 = int_to_ptr.vmem [resolvable:$true] %s24
      %27 = dma.hbm_to_vmem [thread:$0]  %s23, 128, %s25, [#allocation3]
    $region5: #{mlp_forward_pallas.1} parent=1 // pred_fallthru
      _
    // Predicated region
    $region6: #{mlp_forward_pallas.1} parent=1 // pred_check
      _
    $region7: #{mlp_forward_pallas.1} parent=1 // pred_check_branch
      %29 = sbr.rel (0) target = $region9
    $region8: #{mlp_forward_pallas.1} parent=1 // pred_region
      %31 = vsyncadd [#allocation6], 0
      %s32 = sshll.u32 %s1, 4
      %s33 = int_to_ptr.hbm [resolvable:$true] %s32
      %s34 = sshll.u32 [#allocation5], 4
      %s35 = int_to_ptr.vmem [resolvable:$true] %s34
      %40 = dma.hbm_to_vmem [thread:$0]  %s33, 256, %s35, [#allocation6], 64, 64, 4
    $region9: #{mlp_forward_pallas.1} parent=1 // pred_fallthru
      _
    // Predicated region
    $region10: #{mlp_forward_pallas.1} parent=1 // pred_check
      _
    $region11: #{mlp_forward_pallas.1} parent=1 // pred_check_branch
      %42 = sbr.rel (0) target = $region13
    $region12: #{mlp_forward_pallas.1} parent=1 // pred_region
      %44 = vsyncadd [#allocation6], 0
      %s46 = sshll.u32 %s2, 4
      %s47 = int_to_ptr.hbm [resolvable:$true] %s46
      %s48 = sshll.u32 [#allocation7], 4
      %s49 = int_to_ptr.vmem [resolvable:$true] %s48
      %51 = dma.hbm_to_vmem [thread:$0]  %s47, 128, %s49, [#allocation6]
    $region13: #{mlp_forward_pallas.1} parent=1 // pred_fallthru
      _
    // Predicated region
    $region14: #{mlp_forward_pallas.1} parent=1 // pred_check
      _
    $region15: #{mlp_forward_pallas.1} parent=1 // pred_check_branch
      %53 = sbr.rel (0) target = $region17
    $region16: #{mlp_forward_pallas.1} parent=1 // pred_region
      %55 = vsyncadd [#allocation9], 0
      %s56 = sshll.u32 %s3, 4
      %s57 = int_to_ptr.hbm [resolvable:$true] %s56
      %s58 = sshll.u32 [#allocation8], 4
      %s59 = int_to_ptr.vmem [resolvable:$true] %s58
      %64 = dma.hbm_to_vmem [thread:$0]  %s57, 1024, %s59, [#allocation9], 64, 64, 4
    $region17: #{mlp_forward_pallas.1} parent=1 // pred_fallthru
      _
    // Predicated region
    $region18: #{mlp_forward_pallas.1} parent=1 // pred_check
      _
    $region19: #{mlp_forward_pallas.1} parent=1 // pred_check_branch
      %66 = sbr.rel (0) target = $region21
    $region20: #{mlp_forward_pallas.1} parent=1 // pred_region
      %68 = vsyncadd [#allocation9], 0
      %s70 = sshll.u32 %s4, 4
      %s71 = int_to_ptr.hbm [resolvable:$true] %s70
      %s72 = sshll.u32 [#allocation10], 4
      %s73 = int_to_ptr.vmem [resolvable:$true] %s72
      %75 = dma.hbm_to_vmem [thread:$0]  %s71, 128, %s73, [#allocation9]
    $region21: #{mlp_forward_pallas.1} parent=1 // pred_fallthru
      _
    // Predicated region
    $region22: #{mlp_forward_pallas.1} parent=1 // pred_check
      _
    $region23: #{mlp_forward_pallas.1} parent=1 // pred_check_branch
      %77 = sbr.rel (0) target = $region25
    $region24: #{mlp_forward_pallas.1} parent=1 // pred_region
      %79 = vsyncadd [#allocation12], 0
      %s80 = sshll.u32 %s5, 4
      %s81 = int_to_ptr.hbm [resolvable:$true] %s80
      %s82 = sshll.u32 [#allocation11], 4
      %s83 = int_to_ptr.vmem [resolvable:$true] %s82
      %88 = dma.hbm_to_vmem [thread:$0]  %s81, 1024, %s83, [#allocation12], 64, 64, 4
    $region25: #{mlp_forward_pallas.1} parent=1 // pred_fallthru
      _
    // Predicated region
    $region26: #{mlp_forward_pallas.1} parent=1 // pred_check
      _
    $region27: #{mlp_forward_pallas.1} parent=1 // pred_check_branch
      %90 = sbr.rel (0) target = $region29
    $region28: #{mlp_forward_pallas.1} parent=1 // pred_region
      %92 = vsyncadd [#allocation12], 0
      %s94 = sshll.u32 %s6, 4
      %s95 = int_to_ptr.hbm [resolvable:$true] %s94
      %s96 = sshll.u32 [#allocation13], 4
      %s97 = int_to_ptr.vmem [resolvable:$true] %s96
      %99 = dma.hbm_to_vmem [thread:$0]  %s95, 128, %s97, [#allocation12]
    $region29: #{mlp_forward_pallas.1} parent=1 // pred_fallthru
      _
    // Predicated region
    $region30: #{mlp_forward_pallas.1} parent=1 // pred_check
      _
    $region31: #{mlp_forward_pallas.1} parent=1 // pred_check_branch
      %101 = sbr.rel (0) target = $region33
    $region32: #{mlp_forward_pallas.1} parent=1 // pred_region
      %103 = dma.done [#allocation3], 128
    $region33: #{mlp_forward_pallas.1} parent=1 // pred_fallthru
      _
    // Predicated region
    $region34: #{mlp_forward_pallas.1} parent=1 // pred_check
      _
    $region35: #{mlp_forward_pallas.1} parent=1 // pred_check_branch
      %105 = sbr.rel (0) target = $region37
    $region36: #{mlp_forward_pallas.1} parent=1 // pred_region
      %107 = dma.done [#allocation6], 256
    $region37: #{mlp_forward_pallas.1} parent=1 // pred_fallthru
      _
    // Predicated region
    $region38: #{mlp_forward_pallas.1} parent=1 // pred_check
      _
    $region39: #{mlp_forward_pallas.1} parent=1 // pred_check_branch
      %109 = sbr.rel (0) target = $region41
    $region40: #{mlp_forward_pallas.1} parent=1 // pred_region
      %111 = dma.done [#allocation6], 128
    $region41: #{mlp_forward_pallas.1} parent=1 // pred_fallthru
      _
    // Predicated region
    $region42: #{mlp_forward_pallas.1} parent=1 // pred_check
      _
    $region43: #{mlp_forward_pallas.1} parent=1 // pred_check_branch
      %113 = sbr.rel (0) target = $region45
    $region44: #{mlp_forward_pallas.1} parent=1 // pred_region
      %115 = dma.done [#allocation9], 1024
    $region45: #{mlp_forward_pallas.1} parent=1 // pred_fallthru
      _
    // Predicated region
    $region46: #{mlp_forward_pallas.1} parent=1 // pred_check
      _
    $region47: #{mlp_forward_pallas.1} parent=1 // pred_check_branch
      %117 = sbr.rel (0) target = $region49
    $region48: #{mlp_forward_pallas.1} parent=1 // pred_region
      %119 = dma.done [#allocation9], 128
    $region49: #{mlp_forward_pallas.1} parent=1 // pred_fallthru
      _
    // Predicated region
    $region50: #{mlp_forward_pallas.1} parent=1 // pred_check
      _
    $region51: #{mlp_forward_pallas.1} parent=1 // pred_check_branch
      %121 = sbr.rel (0) target = $region53
    $region52: #{mlp_forward_pallas.1} parent=1 // pred_region
      %123 = dma.done [#allocation12], 1024
    $region53: #{mlp_forward_pallas.1} parent=1 // pred_fallthru
      _
    // Predicated region
    $region54: #{mlp_forward_pallas.1} parent=1 // pred_check
      _
    $region55: #{mlp_forward_pallas.1} parent=1 // pred_check_branch
      %125 = sbr.rel (0) target = $region57
    $region56: #{mlp_forward_pallas.1} parent=1 // pred_region
      %127 = dma.done [#allocation12], 128
    $region57: #{mlp_forward_pallas.1} parent=1 // pred_fallthru
      _
    %v129 = vld [vmem:[#allocation2] sm:$0xff]
    %v130 = vpack.c.bf16 %v129, %v129
    %v131 = vld [vmem:[#allocation5] sm:$0xf]
    %v132 = vld [vmem:[#allocation5 + $0x4] sm:$0xf]
    %v133 = vld [vmem:[#allocation5 + $0x8] sm:$0xf]
    %v134 = vld [vmem:[#allocation5 + $0xc] sm:$0xf]
    %v135 = vld [vmem:[#allocation7] sm:$0xff]
    %v140 = vunpack.c.l.b16 %v131
    %v141 = vunpack.c.l.b16 %v132
    %v142 = vunpack.c.l.b16 %v133
    %v143 = vunpack.c.l.b16 %v134
    %v144 = vpack.c.b16 %v141, %v140
    %v145 = vpack.c.b16 %v143, %v142
    %vm148 = vcmask 261120
    %v150 = vsel %vm148, %v130, 0
    %152 = vmatpush.bf16.msra.mxu0 0
    %153 = vmatpush.bf16.msra.mxu0 0
    %154 = vmatpush.bf16.msra.mxu0 0
    %155 = vmatpush.bf16.msra.mxu0 0
    %156 = vmatpush.bf16.msra.mxu0 0
    %157 = vmatpush.bf16.msra.mxu0 0
    %158 = vmatpush.bf16.msra.mxu0 %v145
    %159 = vmatpush.bf16.msra.mxu0 %v144
    %160 = vmatmul.bf16.gmra.mxu0 %v150
    %v161 = vpop.f32.mrf.mxu0
    %v162 = vadd.f32 %v135, %v161
    %v163 = vpop.f32.mrf.mxu0
    %164 = vdwg.mxu0
    %v165 = vmax.f32 %v162, 0.0
    %v166 = vpack.c.bf16 %v165, %v165
    %v167 = vld [vmem:[#allocation8] sm:$0xf]
    %v168 = vld [vmem:[#allocation8 + $0x4] sm:$0xf]
    %v169 = vld [vmem:[#allocation8 + $0x8] sm:$0xf]
    %v170 = vld [vmem:[#allocation8 + $0xc] sm:$0xf]
    %v171 = vld [vmem:[#allocation8 + $0x10] sm:$0xf]
    %v172 = vld [vmem:[#allocation8 + $0x14] sm:$0xf]
    %v173 = vld [vmem:[#allocation8 + $0x18] sm:$0xf]
    %v174 = vld [vmem:[#allocation8 + $0x1c] sm:$0xf]
    %v175 = vld [vmem:[#allocation8 + $0x20] sm:$0xf]
    %v176 = vld [vmem:[#allocation8 + $0x24] sm:$0xf]
    %v177 = vld [vmem:[#allocation8 + $0x28] sm:$0xf]
    %v178 = vld [vmem:[#allocation8 + $0x2c] sm:$0xf]
    %v179 = vld [vmem:[#allocation8 + $0x30] sm:$0xf]
    %v180 = vld [vmem:[#allocation8 + $0x34] sm:$0xf]
    %v181 = vld [vmem:[#allocation8 + $0x38] sm:$0xf]
    %v182 = vld [vmem:[#allocation8 + $0x3c] sm:$0xf]
    %v183 = vld [vmem:[#allocation10] sm:$0xff]
    %v200 = vunpack.c.l.b16 %v167
    %v201 = vunpack.c.l.b16 %v168
    %v202 = vunpack.c.l.b16 %v169
    %v203 = vunpack.c.l.b16 %v170
    %v204 = vunpack.c.l.b16 %v171
    %v205 = vunpack.c.l.b16 %v172
    %v206 = vunpack.c.l.b16 %v173
    %v207 = vunpack.c.l.b16 %v174
    %v208 = vunpack.c.l.b16 %v175
    %v209 = vunpack.c.l.b16 %v176
    %v210 = vunpack.c.l.b16 %v177
    %v211 = vunpack.c.l.b16 %v178
    %v212 = vunpack.c.l.b16 %v179
    %v213 = vunpack.c.l.b16 %v180
    %v214 = vunpack.c.l.b16 %v181
    %v215 = vunpack.c.l.b16 %v182
    %v216 = vpack.c.b16 %v201, %v200
    %v217 = vpack.c.b16 %v203, %v202
    %v218 = vpack.c.b16 %v205, %v204
    %v219 = vpack.c.b16 %v207, %v206
    %v220 = vpack.c.b16 %v209, %v208
    %v221 = vpack.c.b16 %v211, %v210
    %v222 = vpack.c.b16 %v213, %v212
    %v223 = vpack.c.b16 %v215, %v214
    %232 = vmatpush.bf16.msra.mxu0 %v223
    %233 = vmatpush.bf16.msra.mxu0 %v222
    %234 = vmatpush.bf16.msra.mxu0 %v221
    %235 = vmatpush.bf16.msra.mxu0 %v220
    %236 = vmatpush.bf16.msra.mxu0 %v219
    %237 = vmatpush.bf16.msra.mxu0 %v218
    %238 = vmatpush.bf16.msra.mxu0 %v217
    %239 = vmatpush.bf16.msra.mxu0 %v216
    %240 = vmatmul.bf16.gmra.mxu0 %v166
    %v241 = vpop.f32.mrf.mxu0
    %v242 = vadd.f32 %v183, %v241
    %v243 = vpop.f32.mrf.mxu0
    %244 = vdwg.mxu0
    %v245 = vmax.f32 %v242, 0.0
    %v246 = vpack.c.bf16 %v245, %v245
    %v247 = vld [vmem:[#allocation11] sm:$0xf]
    %v248 = vld [vmem:[#allocation11 + $0x4] sm:$0xf]
    %v249 = vld [vmem:[#allocation11 + $0x8] sm:$0xf]
    %v250 = vld [vmem:[#allocation11 + $0xc] sm:$0xf]
    %v251 = vld [vmem:[#allocation11 + $0x10] sm:$0xf]
    %v252 = vld [vmem:[#allocation11 + $0x14] sm:$0xf]
    %v253 = vld [vmem:[#allocation11 + $0x18] sm:$0xf]
    %v254 = vld [vmem:[#allocation11 + $0x1c] sm:$0xf]
    %v255 = vld [vmem:[#allocation11 + $0x20] sm:$0xf]
    %v256 = vld [vmem:[#allocation11 + $0x24] sm:$0xf]
    %v257 = vld [vmem:[#allocation11 + $0x28] sm:$0xf]
    %v258 = vld [vmem:[#allocation11 + $0x2c] sm:$0xf]
    %v259 = vld [vmem:[#allocation11 + $0x30] sm:$0xf]
    %v260 = vld [vmem:[#allocation11 + $0x34] sm:$0xf]
    %v261 = vld [vmem:[#allocation11 + $0x38] sm:$0xf]
    %v262 = vld [vmem:[#allocation11 + $0x3c] sm:$0xf]
    %v263 = vld [vmem:[#allocation13] sm:$0xff]
    %v280 = vunpack.c.l.b16 %v247
    %v281 = vunpack.c.l.b16 %v248
    %v282 = vunpack.c.l.b16 %v249
    %v283 = vunpack.c.l.b16 %v250
    %v284 = vunpack.c.l.b16 %v251
    %v285 = vunpack.c.l.b16 %v252
    %v286 = vunpack.c.l.b16 %v253
    %v287 = vunpack.c.l.b16 %v254
    %v288 = vunpack.c.l.b16 %v255
    %v289 = vunpack.c.l.b16 %v256
    %v290 = vunpack.c.l.b16 %v257
    %v291 = vunpack.c.l.b16 %v258
    %v292 = vunpack.c.l.b16 %v259
    %v293 = vunpack.c.l.b16 %v260
    %v294 = vunpack.c.l.b16 %v261
    %v295 = vunpack.c.l.b16 %v262
    %v296 = vpack.c.b16 %v281, %v280
    %v297 = vpack.c.b16 %v283, %v282
    %v298 = vpack.c.b16 %v285, %v284
    %v299 = vpack.c.b16 %v287, %v286
    %v300 = vpack.c.b16 %v289, %v288
    %v301 = vpack.c.b16 %v291, %v290
    %v302 = vpack.c.b16 %v293, %v292
    %v303 = vpack.c.b16 %v295, %v294
    %312 = vmatpush.bf16.msra.mxu0 %v303
    %313 = vmatpush.bf16.msra.mxu0 %v302
    %314 = vmatpush.bf16.msra.mxu0 %v301
    %315 = vmatpush.bf16.msra.mxu0 %v300
    %316 = vmatpush.bf16.msra.mxu0 %v299
    %317 = vmatpush.bf16.msra.mxu0 %v298
    %318 = vmatpush.bf16.msra.mxu0 %v297
    %319 = vmatpush.bf16.msra.mxu0 %v296
    %320 = vmatmul.bf16.gmra.mxu0 %v246
    %v321 = vpop.f32.mrf.mxu0
    %v322 = vadd.f32 %v263, %v321
    %v323 = vpop.f32.mrf.mxu0
    %324 = vdwg.mxu0
    %325 = vst [vmem:[#allocation14] sm:$0xff] %v322
    // Predicated region
    $region58: #{mlp_forward_pallas.1} parent=1 // pred_check
      _
    $region59: #{mlp_forward_pallas.1} parent=1 // pred_check_branch
      %327 = sbr.rel (0) target = $region61
    $region60: #{mlp_forward_pallas.1} parent=1 // pred_region
      %329 = vsyncadd [#allocation4], 0
      %s331 = sshll.u32 [#allocation14], 4
      %s332 = int_to_ptr.vmem [resolvable:$true] %s331
      %s333 = sshll.u32 %s7, 4
      %s334 = int_to_ptr.hbm [resolvable:$true] %s333
      %336 = dma.vmem_to_hbm [thread:$0]  %s332, 128, %s334, [#allocation4]
    $region61: #{mlp_forward_pallas.1} parent=1 // pred_fallthru
      _
    // Predicated region
    $region62: #{mlp_forward_pallas.1} parent=1 // pred_check
      _
    $region63: #{mlp_forward_pallas.1} parent=1 // pred_check_branch
      %338 = sbr.rel (0) target = $region65
    $region64: #{mlp_forward_pallas.1} parent=1 // pred_region
      %340 = dma.done [#allocation4], 128
    $region65: #{mlp_forward_pallas.1} parent=1 // pred_fallthru
      _
    %341 = vsyncpa [#allocation3], 1
    %342 = vsyncpa [#allocation6], 1
    %343 = vsyncpa [#allocation9], 1
    %344 = vsyncpa [#allocation12], 1
    %345 = vsyncpa [#allocation4], 1

</llo_original>
